<compile_context>
chip_gen: v5e
topology: v5e:2x2
jax: 0.10.0
libtpu: 0.0.40
codegen_flags: <defaults>
</compile_context>

<pallas_src>
import functools

import jax
import jax.numpy as jnp
from jax import lax
from jax.experimental import pallas as pl
from jax.experimental.pallas import tpu as pltpu


def _round_up(a, b):
    return (a + b - 1) // b * b


def _stylepool_kernel(x_ref, o_ref, sum_ref, sq_ref, shift_ref, *, hw, eps, rem):
    """One (row-tile i, HW-tile j) grid step.

    x_ref:     (TR, TH) input tile (any float dtype; accumulated in f32).
    o_ref:     (TR, 2) output tile: col 0 = mean over HW, col 1 = var(+eps).
    sum_ref:   (TR, 128) f32 running sum of (x - shift), lane-wide partials.
    sq_ref:    (TR, 128) f32 running sum of (x - shift)^2.
    shift_ref: (TR, 128) f32 per-row shift (first element of the row),
               broadcast across lanes; makes the one-pass variance stable.
    rem:       static number of valid lanes in the LAST HW tile (1..TH).
    """
    j = pl.program_id(1)
    last = pl.num_programs(1) - 1
    tr, th = x_ref.shape

    @pl.when(j == 0)
    def _init():
        shift_ref[...] = jnp.broadcast_to(
            x_ref[:, 0:1].astype(jnp.float32), shift_ref.shape)
        sum_ref[...] = jnp.zeros_like(sum_ref)
        sq_ref[...] = jnp.zeros_like(sq_ref)

    def accumulate(valid):
        # `valid` is a static lane count for this tile; only VPU work here.
        shift = shift_ref[...]
        s = sum_ref[...]
        q = sq_ref[...]
        full = valid // 128
        tail = valid - full * 128
        for k in range(full):
            d = x_ref[:, k * 128:(k + 1) * 128].astype(jnp.float32) - shift
            s = s + d
            q = q + d * d
        if tail:
            lane = lax.broadcasted_iota(jnp.int32, (tr, 128), 1)
            c = x_ref[:, full * 128:(full + 1) * 128].astype(jnp.float32)
            d = jnp.where(lane < tail, c - shift, 0.0)
            s = s + d
            q = q + d * d
        sum_ref[...] = s
        sq_ref[...] = q

    if rem == th:
        # HW is a multiple of TH: every tile is full, no masking anywhere.
        accumulate(th)
    else:
        @pl.when(j < last)
        def _full_tiles():
            accumulate(th)

        @pl.when(j == last)
        def _ragged_tile():
            accumulate(rem)

    @pl.when(j == last)
    def _finalize():
        # Single cross-lane reduce per row tile (off the per-step hot path).
        s = jnp.sum(sum_ref[...], axis=-1, keepdims=True)   # (TR, 1)
        q = jnp.sum(sq_ref[...], axis=-1, keepdims=True)    # (TR, 1)
        c = shift_ref[:, 0:1]                                # (TR, 1)
        inv_n = 1.0 / hw
        mean = c + s * inv_n
        # Unbiased variance of shifted data: (Q - S^2/n) / (n - 1).
        # HW == 1 intentionally yields NaN (matches torch unbiased var).
        inv_nm1 = 1.0 / (hw - 1.0) if hw > 1.0 else float("nan")
        var = (q - s * s * inv_n) * inv_nm1 + eps
        o_ref[...] = jnp.concatenate([mean, var], axis=-1)


def stylepool(x, eps=1e-5, *, row_tile=512, col_tile=4096,
              vmem_limit_bytes=48 * 1024 * 1024):
    """Pallas StylePool: x (N, C, H, W) -> (N, 2C, 1) = cat(mean_HW, var_HW+eps)."""
    N, C, H, W = x.shape
    HW = H * W
    R = N * C
    xr = x.reshape(R, HW)   # pure view reshape, no copy / no transpose / no pad

    # Sublane tile of the input dtype (f32 -> 8, bf16/f16 -> 16, 1-byte -> 32).
    sub = {4: 8, 2: 16, 1: 32}.get(jnp.dtype(x.dtype).itemsize, 8)

    # Lane (reduction) tile: multiple of 128, no wider than needed.
    TH = min(_round_up(col_tile, 128), _round_up(HW, 128))
    # Row tile: multiple of `sub`; ensure >= 2 row blocks when possible so the
    # 'parallel' axis can shard across the two TensorCores of a v7x chip.
    TR = min(max(row_tile, sub), _round_up(R, sub))
    if R > sub and pl.cdiv(R, TR) < 2:
        TR = _round_up(pl.cdiv(R, 2), sub)

    grid = (pl.cdiv(R, TR), pl.cdiv(HW, TH))
    rem = HW - (grid[1] - 1) * TH          # valid lanes in the last HW tile

    out = pl.pallas_call(
        functools.partial(_stylepool_kernel, hw=float(HW), eps=float(eps),
                          rem=rem),
        out_shape=jax.ShapeDtypeStruct((R, 2), jnp.float32),
        grid=grid,
        in_specs=[pl.BlockSpec((TR, TH), lambda i, j: (i, j))],
        out_specs=pl.BlockSpec((TR, 2), lambda i, j: (i, 0)),
        scratch_shapes=[pltpu.VMEM((TR, 128), jnp.float32),   # sum
                        pltpu.VMEM((TR, 128), jnp.float32),   # sum of squares
                        pltpu.VMEM((TR, 128), jnp.float32)],  # per-row shift
        compiler_params=pltpu.CompilerParams(
            dimension_semantics=("parallel", "arbitrary"),
            vmem_limit_bytes=vmem_limit_bytes),
    )(xr)

    mean = out[:, 0].reshape(N, C)
    var = out[:, 1].reshape(N, C)
    return jnp.concatenate([mean, var], axis=1)[:, :, None].astype(x.dtype)


def _reference(x, eps=1e-5):
    N, C = x.shape[:2]
    xf = x.reshape(N, C, -1)
    return jnp.concatenate(
        [xf.mean(axis=2, keepdims=True),
         xf.var(axis=2, ddof=1, keepdims=True) + eps], axis=1)


if __name__ == "__main__":
    key = jax.random.PRNGKey(0)
    N, C, H, W = 2, 4, 16, 16
    x = jax.random.normal(key, (N, C, H, W), jnp.float32)

    out = jax.block_until_ready(jax.jit(stylepool)(x))
    ref = _reference(x)
    assert out.shape == (N, 2 * C, 1), out.shape
    assert bool(jnp.all(jnp.isfinite(out)))
    assert jnp.allclose(out, ref, rtol=1e-4, atol=1e-5), float(
        jnp.max(jnp.abs(out - ref)))

    # Ragged / multi-step reduction path: odd HW, several lane tiles, nonzero
    # mean (exercises the masked last tile and the shifted variance).
    x2 = jax.random.normal(jax.random.PRNGKey(1), (2, 4, 17, 13),
                           jnp.float32) + 3.0
    out2 = jax.block_until_ready(
        jax.jit(functools.partial(stylepool, col_tile=128))(x2))
    ref2 = _reference(x2)
    assert out2.shape == (2, 8, 1), out2.shape
    assert jnp.allclose(out2, ref2, rtol=1e-4, atol=1e-5), float(
        jnp.max(jnp.abs(out2 - ref2)))

    print("KERNEL_OK")
</pallas_src>

<mosaic_0001>
module attributes {stable_mosaic.version = 11 : i64} {
  func.func @_stylepool_kernel(%arg0: i32, %arg1: i32, %arg2: memref<8x256xf32, #tpu.memory_space<vmem>>, %arg3: memref<8x2xf32, #tpu.memory_space<vmem>>, %arg4: memref<8x128xf32, #tpu.memory_space<vmem>>, %arg5: memref<8x128xf32, #tpu.memory_space<vmem>>, %arg6: memref<8x128xf32, #tpu.memory_space<vmem>>) attributes {dimension_semantics = [#tpu.dimension_semantics<parallel>, #tpu.dimension_semantics<arbitrary>], iteration_bounds = array<i64: 1, 1>, scalar_prefetch = 0 : i64, scratch_operands = 3 : i64, tpu.core_type = #tpu.core_type<tc>, window_params = [{transform_indices = @transform_0, window_bounds = array<i64: 8, 256>}, {transform_indices = @transform_1, window_bounds = array<i64: 8, 2>}]} {
    %c0_i32 = arith.constant 0 : i32
    %0 = arith.cmpi eq, %arg1, %c0_i32 : i32
    %1 = arith.extui %0 : i1 to i32
    %c0_i32_0 = arith.constant 0 : i32
    %2 = arith.cmpi ne, %1, %c0_i32_0 : i32
    scf.if %2 {
      %c0_15 = arith.constant 0 : index
      %c0_16 = arith.constant 0 : index
      %21 = vector.load %arg2[%c0_15, %c0_16] : memref<8x256xf32, #tpu.memory_space<vmem>>, vector<8x1xf32>
      %22 = vector.shape_cast %21 : vector<8x1xf32> to vector<8x1xf32>
      %23 = vector.broadcast %22 : vector<8x1xf32> to vector<8x128xf32>
      %c0_17 = arith.constant 0 : index
      %c0_18 = arith.constant 0 : index
      %24 = vector.load %arg6[%c0_17, %c0_18] : memref<8x128xf32, #tpu.memory_space<vmem>>, vector<8x128xf32>
      tpu.vector_store %arg6[%c0_17, %c0_18], %23 {strides = array<i32>} : memref<8x128xf32, #tpu.memory_space<vmem>>, vector<8x128xf32>,
      %cst = arith.constant 0.000000e+00 : f32
      %25 = vector.broadcast %cst : f32 to vector<8x128xf32>
      %c0_19 = arith.constant 0 : index
      %c0_20 = arith.constant 0 : index
      %26 = vector.load %arg4[%c0_19, %c0_20] : memref<8x128xf32, #tpu.memory_space<vmem>>, vector<8x128xf32>
      tpu.vector_store %arg4[%c0_19, %c0_20], %25 {strides = array<i32>} : memref<8x128xf32, #tpu.memory_space<vmem>>, vector<8x128xf32>,
      %cst_21 = arith.constant 0.000000e+00 : f32
      %27 = vector.broadcast %cst_21 : f32 to vector<8x128xf32>
      %c0_22 = arith.constant 0 : index
      %c0_23 = arith.constant 0 : index
      %28 = vector.load %arg5[%c0_22, %c0_23] : memref<8x128xf32, #tpu.memory_space<vmem>>, vector<8x128xf32>
      tpu.vector_store %arg5[%c0_22, %c0_23], %27 {strides = array<i32>} : memref<8x128xf32, #tpu.memory_space<vmem>>, vector<8x128xf32>,
    } else {
    }
    %c0 = arith.constant 0 : index
    %c0_1 = arith.constant 0 : index
    %3 = vector.load %arg6[%c0, %c0_1] : memref<8x128xf32, #tpu.memory_space<vmem>>, vector<8x128xf32>
    %c0_2 = arith.constant 0 : index
    %c0_3 = arith.constant 0 : index
    %4 = vector.load %arg4[%c0_2, %c0_3] : memref<8x128xf32, #tpu.memory_space<vmem>>, vector<8x128xf32>
    %c0_4 = arith.constant 0 : index
    %c0_5 = arith.constant 0 : index
    %5 = vector.load %arg5[%c0_4, %c0_5] : memref<8x128xf32, #tpu.memory_space<vmem>>, vector<8x128xf32>
    %c0_6 = arith.constant 0 : index
    %c0_7 = arith.constant 0 : index
    %6 = vector.load %arg2[%c0_6, %c0_7] : memref<8x256xf32, #tpu.memory_space<vmem>>, vector<8x128xf32>
    %7 = arith.subf %6, %3 : vector<8x128xf32>
    %8 = arith.addf %4, %7 : vector<8x128xf32>
    %9 = arith.mulf %7, %7 : vector<8x128xf32>
    %10 = arith.addf %5, %9 : vector<8x128xf32>
    %c0_8 = arith.constant 0 : index
    %c128 = arith.constant 128 : index
    %11 = vector.load %arg2[%c0_8, %c128] : memref<8x256xf32, #tpu.memory_space<vmem>>, vector<8x128xf32>
    %12 = arith.subf %11, %3 : vector<8x128xf32>
    %13 = arith.addf %8, %12 : vector<8x128xf32>
    %14 = arith.mulf %12, %12 : vector<8x128xf32>
    %15 = arith.addf %10, %14 : vector<8x128xf32>
    %c0_9 = arith.constant 0 : index
    %c0_10 = arith.constant 0 : index
    %16 = vector.load %arg4[%c0_9, %c0_10] : memref<8x128xf32, #tpu.memory_space<vmem>>, vector<8x128xf32>
    tpu.vector_store %arg4[%c0_9, %c0_10], %13 {strides = array<i32>} : memref<8x128xf32, #tpu.memory_space<vmem>>, vector<8x128xf32>,
    %c0_11 = arith.constant 0 : index
    %c0_12 = arith.constant 0 : index
    %17 = vector.load %arg5[%c0_11, %c0_12] : memref<8x128xf32, #tpu.memory_space<vmem>>, vector<8x128xf32>
    tpu.vector_store %arg5[%c0_11, %c0_12], %15 {strides = array<i32>} : memref<8x128xf32, #tpu.memory_space<vmem>>, vector<8x128xf32>,
    %c0_i32_13 = arith.constant 0 : i32
    %18 = arith.cmpi eq, %arg1, %c0_i32_13 : i32
    %19 = arith.extui %18 : i1 to i32
    %c0_i32_14 = arith.constant 0 : i32
    %20 = arith.cmpi ne, %19, %c0_i32_14 : i32
    scf.if %20 {
      %c0_15 = arith.constant 0 : index
      %c0_16 = arith.constant 0 : index
      %21 = vector.load %arg4[%c0_15, %c0_16] : memref<8x128xf32, #tpu.memory_space<vmem>>, vector<8x128xf32>
      %cst = arith.constant dense<0.000000e+00> : vector<8xf32>
      %22 = vector.multi_reduction <add>, %21, %cst [1] : vector<8x128xf32> to vector<8xf32>
      %23 = vector.shape_cast %22 : vector<8xf32> to vector<8x1xf32>
      %c0_17 = arith.constant 0 : index
      %c0_18 = arith.constant 0 : index
      %24 = vector.load %arg5[%c0_17, %c0_18] : memref<8x128xf32, #tpu.memory_space<vmem>>, vector<8x128xf32>
      %cst_19 = arith.constant dense<0.000000e+00> : vector<8xf32>
      %25 = vector.multi_reduction <add>, %24, %cst_19 [1] : vector<8x128xf32> to vector<8xf32>
      %26 = vector.shape_cast %25 : vector<8xf32> to vector<8x1xf32>
      %c0_20 = arith.constant 0 : index
      %c0_21 = arith.constant 0 : index
      %27 = vector.load %arg6[%c0_20, %c0_21] : memref<8x128xf32, #tpu.memory_space<vmem>>, vector<8x1xf32>
      %cst_22 = arith.constant 3.906250e-03 : f32
      %28 = vector.broadcast %cst_22 : f32 to vector<8x1xf32>
      %29 = arith.mulf %23, %28 : vector<8x1xf32>
      %30 = arith.addf %27, %29 : vector<8x1xf32>
      %31 = arith.mulf %23, %23 : vector<8x1xf32>
      %cst_23 = arith.constant 3.906250e-03 : f32
      %32 = vector.broadcast %cst_23 : f32 to vector<8x1xf32>
      %33 = arith.mulf %31, %32 : vector<8x1xf32>
      %34 = arith.subf %26, %33 : vector<8x1xf32>
      %cst_24 = arith.constant 0.00392156886 : f32
      %35 = vector.broadcast %cst_24 : f32 to vector<8x1xf32>
      %36 = arith.mulf %34, %35 : vector<8x1xf32>
      %cst_25 = arith.constant 9.99999974E-6 : f32
      %37 = vector.broadcast %cst_25 : f32 to vector<8x1xf32>
      %38 = arith.addf %36, %37 : vector<8x1xf32>
      %39 = tpu.concatenate %30, %38 in 1 : vector<8x1xf32>, vector<8x1xf32> -> vector<8x2xf32>
      %c0_26 = arith.constant 0 : index
      %c0_27 = arith.constant 0 : index
      %40 = vector.load %arg3[%c0_26, %c0_27] : memref<8x2xf32, #tpu.memory_space<vmem>>, vector<8x2xf32>
      tpu.vector_store %arg3[%c0_26, %c0_27], %39 {strides = array<i32>} : memref<8x2xf32, #tpu.memory_space<vmem>>, vector<8x2xf32>,
    } else {
    }
    return
  }
  func.func @transform_0(%arg0: i32, %arg1: i32) -> (i32, i32) {
    %c0_i32 = arith.constant 0 : i32
    return %arg0, %arg1 : i32, i32
  }
  func.func @transform_1(%arg0: i32, %arg1: i32) -> (i32, i32) {
    %c0_i32 = arith.constant 0 : i32
    %c0_i32_0 = arith.constant 0 : i32
    return %arg0, %c0_i32 : i32, i32
  }
}

</mosaic_0001>

<llo_original>
// kernel: squeeze.2
$region0: #{squeeze.2}
  %s0 = inlined_call_operand.vmem [shape: f32[8], index: 0, kind: input, shape index: {}]
  %s1 = inlined_call_operand.vmem [shape: f32[2,4], index: 1, kind: output, shape index: {}]
  $region1: #{squeeze.2} parent=0
    #allocation0 [shape = 'u8[4096]{0}', space=vmem, size = 0x1000, scoped, tag = 'scoped mem for output reshape']
    #allocation1 [shape = 'u8[4096]{0}', space=vmem, size = 0x1000, scoped, tag = 'scoped mem for input reshape']
    %s3 = ssub.s32 2, 1
    %v4 = vld [vmem:[%s0] sm:%s3]
    %5 = vst [vmem:[#allocation1] sm:%s3] %v4
    %v6 = vld [vmem:[#allocation1] sm:$0x1]
    %vm7 = vcmask 31744
    %8 = vst.msk [vmem:[#allocation0] sm:$0x1] %vm7, %v6
    %v9 = vld [vmem:[#allocation1] sm:$0x1]
    %10 = vrot.lane.b32.xlu0 %v9, 124
    %v11 = vpop.permute.xlu0 %10
    %vm12 = vcmask 31744
    %s13 = scalar_lea.vmem [#allocation0], 1
    %14 = vst.msk [vmem:[%s13] sm:$0x1] %vm12, %v11
    %s16 = ssub.s32 4, 1
    %v17 = vld [vmem:[#allocation0] sm:%s16]
    %s19 = ssub.s32 4, 1
    %20 = vst [vmem:[%s1] sm:%s19] %v17

// kernel: stylepool.1
$region0: #{stylepool.1}
  #allocation0 [shape = 'u32[]', space=smem, size = 0x4, offset = 0x4, fixed_abs, tag = 'smem constant byte address 0x4 - core index']
  #allocation1 [shape = 'u32[72,128]{1,0:T(1,128)}', space=vmem, size = 0x9000, scoped, tag = 'internal scratch']
  #allocation2 [shape = 'f32[8,128]{1,0:T(8,128)}', space=vmem, size = 0x1000, scoped, tag = 'scratch operand']
  #allocation3 [shape = 'f32[8,128]{1,0:T(8,128)}', space=vmem, size = 0x1000, scoped, tag = 'scratch operand']
  #allocation4 [shape = 'f32[8,128]{1,0:T(8,128)}', space=vmem, size = 0x1000, scoped, tag = 'scratch operand']
  %s0 = inlined_call_operand.vmem [shape: f32[8,256], index: 0, kind: input, shape index: {}]
  %s1 = inlined_call_operand.vmem [shape: f32[8,2], index: 1, kind: output, shape index: {}]
  %s2 = sld [smem:[#allocation0]]
  $region22: #{stylepool.1} parent=0
    _
  %s4 = ssub.s32 1, %s2
  %s5 = scalar_select 0, %s4, %s2
  // Predicated region
  $region2: #{stylepool.1} parent=0 // pred_check
    _
  $region3: #{stylepool.1} parent=0 // pred_check_branch
    %7 = sbr.rel (0) target = $region5
  $region4: #{stylepool.1} parent=0 // pred_region
    _
  $region5: #{stylepool.1} parent=0 // pred_fallthru
    _
  %p8 = scmp.eq.s32.totalorder 0, 0
  // Predicated region
  $region6: #{stylepool.1} parent=0 // pred_check
    %p9 = pneg %p8
  $region7: #{stylepool.1} parent=0 // pred_check_branch
    %11 = sbr.rel (%p9) target = $region9
  $region8: #{stylepool.1} parent=0 // pred_region
    %v12 = vld [vmem:[%s0] sm:$0xff]
    %14 = vset.pattern.permute.xlu0 0
    %15 = vperm.xlu0 %14, %v12
    %v16 = vpop.permute.xlu0 %15
    %18 = vst [vmem:[#allocation4] sm:$0xff] %v16
    %19 = vst [vmem:[#allocation2] sm:$0xff] 0.0
    %20 = vst [vmem:[#allocation3] sm:$0xff] 0.0
  $region9: #{stylepool.1} parent=0 // pred_fallthru
    _
  %v21 = vld [vmem:[#allocation4] sm:$0xff]
  %v22 = vld [vmem:[#allocation2] sm:$0xff]
  %v23 = vld [vmem:[#allocation3] sm:$0xff]
  %v24 = vld [vmem:[%s0] sm:$0xff]
  %v25 = vsub.f32 %v24, %v21
  %v26 = vadd.f32 %v22, %v25
  %v27 = vmul.f32 %v25, %v25
  %v28 = vadd.f32 %v23, %v27
  %v29 = vld [vmem:[%s0 + $0x8] sm:$0xff]
  %v30 = vsub.f32 %v29, %v21
  %v31 = vadd.f32 %v26, %v30
  %v32 = vmul.f32 %v30, %v30
  %v33 = vadd.f32 %v28, %v32
  %34 = vst [vmem:[#allocation2] sm:$0xff] %v31
  %35 = vst [vmem:[#allocation3] sm:$0xff] %v33
  // Predicated region
  $region10: #{stylepool.1} parent=0 // pred_check
    %p36 = pneg %p8
  $region11: #{stylepool.1} parent=0 // pred_check_branch
    %38 = sbr.rel (%p36) target = $region13
  $region12: #{stylepool.1} parent=0 // pred_region
    %v39 = vld [vmem:[#allocation2] sm:$0xff]
    %40 = vadd.xlane.f32.xlu0 %v39
    %v41 = vpop.xlane.xlu0 %40
    %v42 = vld [vmem:[#allocation3] sm:$0xff]
    %43 = vadd.xlane.f32.xlu0 %v42
    %v44 = vpop.xlane.xlu0 %43
    %v45 = vld [vmem:[#allocation4] sm:$0xff]
    %v46 = vmul.f32 %v41, 0.00390625
    %v47 = vadd.f32 %v45, %v46
    %v48 = vmul.f32 %v41, %v41
    %v49 = vmul.f32 %v48, 0.00390625
    %v50 = vsub.f32 %v44, %v49
    %v51 = vmul.f32 %v50, 0.003921569
    %v52 = vadd.f32 %v51, 1e-05
    %vm53 = vcmask 7168
    %v54 = vsel %vm53, %v47, %v52
    %vm55 = vcmask 15360
    %56 = vst.msk [vmem:[%s1] sm:$0xff] %vm55, %v54
  $region13: #{stylepool.1} parent=0 // pred_fallthru
    _
  // Predicated region
  $region14: #{stylepool.1} parent=0 // pred_check
    _
  $region15: #{stylepool.1} parent=0 // pred_check_branch
    %58 = sbr.rel (0) target = $region17
  $region16: #{stylepool.1} parent=0 // pred_region
    _
  $region17: #{stylepool.1} parent=0 // pred_fallthru
    _
  // Predicated region
  $region18: #{stylepool.1} parent=0 // pred_check
    _
  $region19: #{stylepool.1} parent=0 // pred_check_branch
    %60 = sbr.rel (0) target = $region21
  $region20: #{stylepool.1} parent=0 // pred_region
    _
  $region21: #{stylepool.1} parent=0 // pred_fallthru
    _

</llo_original>
